<compile_context>
chip_gen: v7x
topology: tpu7x:2x2x1
jax: 0.10.0
libtpu: 0.0.40
codegen_flags: <defaults>
</compile_context>

<pallas_src>
import jax
import jax.numpy as jnp
from jax.experimental import pallas as pl
from jax.experimental.pallas import tpu as pltpu

_LANES = 128


def _round_up(x, m):
    return ((x + m - 1) // m) * m


def weighted_ce_loss(logits, target, *, tile_rows=512):
    """logits: (N, 2), target: (N,) int class indices -> scalar f32 loss."""
    n, c = logits.shape
    assert c == 2, "WeightedCELoss kernel specialises the binary (C=2) case"

    rows_needed = pl.cdiv(n, _LANES)
    tile_rows_eff = min(tile_rows, _round_up(rows_needed, 8))   # multiple of 8
    rows_total = _round_up(rows_needed, tile_rows_eff)
    n_pad = rows_total * _LANES
    num_tiles = rows_total // tile_rows_eff
    pad = n_pad - n

    # Lane-dense layout plumbing (wrapper side): de-interleave class columns
    # and reshape everything to (rows, 128).
    x0 = jnp.pad(logits[:, 0], (0, pad)).reshape(rows_total, _LANES)
    x1 = jnp.pad(logits[:, 1], (0, pad)).reshape(rows_total, _LANES)
    t = jnp.pad(target.astype(jnp.int32), (0, pad)).reshape(rows_total, _LANES)

    def kernel(x0_ref, x1_ref, t_ref, o_ref, s0_ref, s1_ref, n1_ref):
        step = pl.program_id(0)

        @pl.when(step == 0)
        def _():
            s0_ref[...] = jnp.zeros_like(s0_ref)   # sum nll over class-0 rows
            s1_ref[...] = jnp.zeros_like(s1_ref)   # sum nll over class-1 rows
            n1_ref[...] = jnp.zeros_like(n1_ref)   # positive count

        x0_t = x0_ref[...].astype(jnp.float32)
        x1_t = x1_ref[...].astype(jnp.float32)
        tt = t_ref[...]
        rows, lanes = x0_t.shape

        # Validity mask for the padded tail, from the global element index.
        sub = jax.lax.broadcasted_iota(jnp.int32, (rows, lanes), 0)
        lane = jax.lax.broadcasted_iota(jnp.int32, (rows, lanes), 1)
        gidx = (step * rows + sub) * lanes + lane
        valid = (gidx < n).astype(jnp.float32)

        # Binary CE: nll_i = logsumexp(x0,x1) - x_{t_i} = softplus(x_{1-t}-x_t)
        d = x1_t - x0_t
        is_pos = tt == 1
        z = jnp.where(is_pos, -d, d)
        nll = jnp.maximum(z, 0.0) + jnp.log(1.0 + jnp.exp(-jnp.abs(z)))
        nll = nll * valid

        pos_m = jnp.where(is_pos, valid, 0.0)
        s1_ref[...] += jnp.sum(nll * pos_m, axis=(0, 1), keepdims=True)
        s0_ref[...] += jnp.sum(nll * (valid - pos_m), axis=(0, 1), keepdims=True)
        n1_ref[...] += jnp.sum(pos_m, axis=(0, 1), keepdims=True)

        @pl.when(step == pl.num_programs(0) - 1)
        def _():
            n_f = jnp.float32(n)
            pos = n1_ref[...]
            neg = n_f - pos
            w_pos = neg / (pos + 1e-5)   # weight for class 1 ("pos_weight")
            w_neg = pos / (neg + 1e-5)   # weight for class 0 ("neg_weight")
            num = w_neg * s0_ref[...] + w_pos * s1_ref[...]
            den = w_neg * neg + w_pos * pos
            o_ref[...] = num / den       # NaN/inf if the batch is single-class,
                                         # same as the PyTorch module.

    bytes_accessed = int(2 * x0.size * x0.dtype.itemsize + t.size * 4 + 4)
    out = pl.pallas_call(
        kernel,
        out_shape=jax.ShapeDtypeStruct((1, 1), jnp.float32),
        grid=(num_tiles,),
        in_specs=[
            pl.BlockSpec((tile_rows_eff, _LANES), lambda i: (i, 0)),
            pl.BlockSpec((tile_rows_eff, _LANES), lambda i: (i, 0)),
            pl.BlockSpec((tile_rows_eff, _LANES), lambda i: (i, 0)),
        ],
        out_specs=pl.BlockSpec((1, 1), lambda i: (0, 0)),
        scratch_shapes=[
            pltpu.VMEM((1, 1), jnp.float32),
            pltpu.VMEM((1, 1), jnp.float32),
            pltpu.VMEM((1, 1), jnp.float32),
        ],
        compiler_params=pltpu.CompilerParams(
            dimension_semantics=("arbitrary",)),
        cost_estimate=pl.CostEstimate(
            flops=10 * n_pad,
            transcendentals=2 * n_pad,
            bytes_accessed=bytes_accessed),
    )(x0, x1, t)
    return out[0, 0]


def _reference(logits, target):
    # plain-JAX reference mirroring torch.nn.functional.cross_entropy semantics
    n = logits.shape[0]
    x = logits.astype(jnp.float32)
    pos = jnp.sum(target.astype(jnp.float32))
    neg = n - pos
    w = jnp.stack([pos / (neg + 1e-5), neg / (pos + 1e-5)])   # [neg_w, pos_w]
    lse = jax.scipy.special.logsumexp(x, axis=-1)
    x_t = jnp.take_along_axis(x, target[:, None], axis=-1)[:, 0]
    w_i = w[target]
    return jnp.sum(w_i * (lse - x_t)) / jnp.sum(w_i)


if __name__ == "__main__":
    key = jax.random.PRNGKey(0)
    k1, k2 = jax.random.split(key)
    N, C = 300, 2   # non-multiple of 128 to exercise the masked padded tail
    logits = jax.random.normal(k1, (N, C), dtype=jnp.float32)
    target = jax.random.randint(k2, (N,), 0, 2, dtype=jnp.int32)

    loss = weighted_ce_loss(logits, target)
    jax.block_until_ready(loss)

    ref = _reference(logits, target)
    assert jnp.allclose(loss, ref, rtol=1e-5, atol=1e-5), (loss, ref)
    print("KERNEL_OK")
</pallas_src>

<mosaic_0001>
module attributes {stable_mosaic.version = 11 : i64} {
  func.func @kernel(%arg0: i32, %arg1: memref<8x128xf32, #tpu.memory_space<vmem>>, %arg2: memref<8x128xf32, #tpu.memory_space<vmem>>, %arg3: memref<8x128xi32, #tpu.memory_space<vmem>>, %arg4: memref<1x1xf32, #tpu.memory_space<vmem>>, %arg5: memref<1x1xf32, #tpu.memory_space<vmem>>, %arg6: memref<1x1xf32, #tpu.memory_space<vmem>>, %arg7: memref<1x1xf32, #tpu.memory_space<vmem>>) attributes {dimension_semantics = [#tpu.dimension_semantics<arbitrary>], iteration_bounds = array<i64: 1>, scalar_prefetch = 0 : i64, scratch_operands = 3 : i64, tpu.core_type = #tpu.core_type<tc>, window_params = [{transform_indices = @transform_0, window_bounds = array<i64: 8, 128>}, {transform_indices = @transform_1, window_bounds = array<i64: 8, 128>}, {transform_indices = @transform_2, window_bounds = array<i64: 8, 128>}, {pipeline_mode = #tpu.pipeline_mode<synchronous>, transform_indices = @transform_3, window_bounds = array<i64: 1, 1>}]} {
    %c0_i32 = arith.constant 0 : i32
    %0 = arith.cmpi eq, %arg0, %c0_i32 : i32
    %1 = arith.extui %0 : i1 to i32
    %c0_i32_0 = arith.constant 0 : i32
    %2 = arith.cmpi ne, %1, %c0_i32_0 : i32
    scf.if %2 {
      %cst_27 = arith.constant 0.000000e+00 : f32
      %67 = vector.broadcast %cst_27 : f32 to vector<1x1xf32>
      %c0_28 = arith.constant 0 : index
      %c0_29 = arith.constant 0 : index
      %68 = vector.load %arg5[%c0_28, %c0_29] : memref<1x1xf32, #tpu.memory_space<vmem>>, vector<1x1xf32>
      tpu.vector_store %arg5[%c0_28, %c0_29], %67 {strides = array<i32>} : memref<1x1xf32, #tpu.memory_space<vmem>>, vector<1x1xf32>,
      %cst_30 = arith.constant 0.000000e+00 : f32
      %69 = vector.broadcast %cst_30 : f32 to vector<1x1xf32>
      %c0_31 = arith.constant 0 : index
      %c0_32 = arith.constant 0 : index
      %70 = vector.load %arg6[%c0_31, %c0_32] : memref<1x1xf32, #tpu.memory_space<vmem>>, vector<1x1xf32>
      tpu.vector_store %arg6[%c0_31, %c0_32], %69 {strides = array<i32>} : memref<1x1xf32, #tpu.memory_space<vmem>>, vector<1x1xf32>,
      %cst_33 = arith.constant 0.000000e+00 : f32
      %71 = vector.broadcast %cst_33 : f32 to vector<1x1xf32>
      %c0_34 = arith.constant 0 : index
      %c0_35 = arith.constant 0 : index
      %72 = vector.load %arg7[%c0_34, %c0_35] : memref<1x1xf32, #tpu.memory_space<vmem>>, vector<1x1xf32>
      tpu.vector_store %arg7[%c0_34, %c0_35], %71 {strides = array<i32>} : memref<1x1xf32, #tpu.memory_space<vmem>>, vector<1x1xf32>,
    } else {
    }
    %c0 = arith.constant 0 : index
    %c0_1 = arith.constant 0 : index
    %3 = vector.load %arg1[%c0, %c0_1] : memref<8x128xf32, #tpu.memory_space<vmem>>, vector<8x128xf32>
    %c0_2 = arith.constant 0 : index
    %c0_3 = arith.constant 0 : index
    %4 = vector.load %arg2[%c0_2, %c0_3] : memref<8x128xf32, #tpu.memory_space<vmem>>, vector<8x128xf32>
    %c0_4 = arith.constant 0 : index
    %c0_5 = arith.constant 0 : index
    %5 = vector.load %arg3[%c0_4, %c0_5] : memref<8x128xi32, #tpu.memory_space<vmem>>, vector<8x128xi32>
    %6 = tpu.iota {dimensions = array<i32: 0>} : vector<8x128xi32>
    %7 = tpu.iota {dimensions = array<i32: 1>} : vector<8x128xi32>
    %c8_i32 = arith.constant 8 : i32
    %8 = arith.muli %arg0, %c8_i32 : i32
    %9 = vector.broadcast %8 : i32 to vector<8x128xi32>
    %10 = arith.addi %9, %6 : vector<8x128xi32>
    %c128_i32 = arith.constant 128 : i32
    %11 = vector.broadcast %c128_i32 : i32 to vector<8x128xi32>
    %12 = arith.muli %10, %11 : vector<8x128xi32>
    %13 = arith.addi %12, %7 : vector<8x128xi32>
    %c300_i32 = arith.constant 300 : i32
    %14 = vector.broadcast %c300_i32 : i32 to vector<8x128xi32>
    %15 = arith.cmpi slt, %13, %14 : vector<8x128xi32>
    %16 = arith.extui %15 : vector<8x128xi1> to vector<8x128xi32>
    %17 = arith.sitofp %16 : vector<8x128xi32> to vector<8x128xf32>
    %18 = arith.subf %4, %3 : vector<8x128xf32>
    %c1_i32 = arith.constant 1 : i32
    %19 = vector.broadcast %c1_i32 : i32 to vector<8x128xi32>
    %20 = arith.cmpi eq, %5, %19 : vector<8x128xi32>
    %cst = arith.constant 0.000000e+00 : f32
    %21 = vector.broadcast %cst : f32 to vector<8x128xf32>
    %22 = arith.subf %21, %18 : vector<8x128xf32>
    %23 = arith.select %20, %22, %18 : vector<8x128xi1>, vector<8x128xf32>
    %cst_6 = arith.constant 0.000000e+00 : f32
    %24 = vector.broadcast %cst_6 : f32 to vector<8x128xf32>
    %25 = arith.maximumf %23, %24 : vector<8x128xf32>
    %26 = math.absf %23 : vector<8x128xf32>
    %cst_7 = arith.constant 0.000000e+00 : f32
    %27 = vector.broadcast %cst_7 : f32 to vector<8x128xf32>
    %28 = arith.subf %27, %26 : vector<8x128xf32>
    %29 = math.exp %28 : vector<8x128xf32>
    %cst_8 = arith.constant 1.000000e+00 : f32
    %30 = vector.broadcast %cst_8 : f32 to vector<8x128xf32>
    %31 = arith.addf %30, %29 : vector<8x128xf32>
    %32 = math.log %31 : vector<8x128xf32>
    %33 = arith.addf %25, %32 : vector<8x128xf32>
    %34 = arith.mulf %33, %17 : vector<8x128xf32>
    %cst_9 = arith.constant 0.000000e+00 : f32
    %35 = vector.broadcast %cst_9 : f32 to vector<8x128xf32>
    %36 = arith.select %20, %17, %35 : vector<8x128xi1>, vector<8x128xf32>
    %c0_10 = arith.constant 0 : index
    %c0_11 = arith.constant 0 : index
    %37 = vector.load %arg6[%c0_10, %c0_11] : memref<1x1xf32, #tpu.memory_space<vmem>>, vector<1x1xf32>
    %38 = arith.mulf %34, %36 : vector<8x128xf32>
    %39 = vector.shape_cast %38 : vector<8x128xf32> to vector<1x8x128xf32>
    %cst_12 = arith.constant dense<0.000000e+00> : vector<1xf32>
    %40 = vector.multi_reduction <add>, %39, %cst_12 [1, 2] : vector<1x8x128xf32> to vector<1xf32>
    %41 = vector.shape_cast %40 : vector<1xf32> to vector<1x1x1xf32>
    %42 = vector.extract %41[0, 0, 0] : f32 from vector<1x1x1xf32>
    %43 = vector.broadcast %42 : f32 to vector<1x1xf32>
    %44 = arith.addf %37, %43 : vector<1x1xf32>
    %c0_13 = arith.constant 0 : index
    %c0_14 = arith.constant 0 : index
    %45 = vector.load %arg6[%c0_13, %c0_14] : memref<1x1xf32, #tpu.memory_space<vmem>>, vector<1x1xf32>
    tpu.vector_store %arg6[%c0_13, %c0_14], %44 {strides = array<i32>} : memref<1x1xf32, #tpu.memory_space<vmem>>, vector<1x1xf32>,
    %c0_15 = arith.constant 0 : index
    %c0_16 = arith.constant 0 : index
    %46 = vector.load %arg5[%c0_15, %c0_16] : memref<1x1xf32, #tpu.memory_space<vmem>>, vector<1x1xf32>
    %47 = arith.subf %17, %36 : vector<8x128xf32>
    %48 = arith.mulf %34, %47 : vector<8x128xf32>
    %49 = vector.shape_cast %48 : vector<8x128xf32> to vector<1x8x128xf32>
    %cst_17 = arith.constant dense<0.000000e+00> : vector<1xf32>
    %50 = vector.multi_reduction <add>, %49, %cst_17 [1, 2] : vector<1x8x128xf32> to vector<1xf32>
    %51 = vector.shape_cast %50 : vector<1xf32> to vector<1x1x1xf32>
    %52 = vector.extract %51[0, 0, 0] : f32 from vector<1x1x1xf32>
    %53 = vector.broadcast %52 : f32 to vector<1x1xf32>
    %54 = arith.addf %46, %53 : vector<1x1xf32>
    %c0_18 = arith.constant 0 : index
    %c0_19 = arith.constant 0 : index
    %55 = vector.load %arg5[%c0_18, %c0_19] : memref<1x1xf32, #tpu.memory_space<vmem>>, vector<1x1xf32>
    tpu.vector_store %arg5[%c0_18, %c0_19], %54 {strides = array<i32>} : memref<1x1xf32, #tpu.memory_space<vmem>>, vector<1x1xf32>,
    %c0_20 = arith.constant 0 : index
    %c0_21 = arith.constant 0 : index
    %56 = vector.load %arg7[%c0_20, %c0_21] : memref<1x1xf32, #tpu.memory_space<vmem>>, vector<1x1xf32>
    %57 = vector.shape_cast %36 : vector<8x128xf32> to vector<1x8x128xf32>
    %cst_22 = arith.constant dense<0.000000e+00> : vector<1xf32>
    %58 = vector.multi_reduction <add>, %57, %cst_22 [1, 2] : vector<1x8x128xf32> to vector<1xf32>
    %59 = vector.shape_cast %58 : vector<1xf32> to vector<1x1x1xf32>
    %60 = vector.extract %59[0, 0, 0] : f32 from vector<1x1x1xf32>
    %61 = vector.broadcast %60 : f32 to vector<1x1xf32>
    %62 = arith.addf %56, %61 : vector<1x1xf32>
    %c0_23 = arith.constant 0 : index
    %c0_24 = arith.constant 0 : index
    %63 = vector.load %arg7[%c0_23, %c0_24] : memref<1x1xf32, #tpu.memory_space<vmem>>, vector<1x1xf32>
    tpu.vector_store %arg7[%c0_23, %c0_24], %62 {strides = array<i32>} : memref<1x1xf32, #tpu.memory_space<vmem>>, vector<1x1xf32>,
    %c0_i32_25 = arith.constant 0 : i32
    %64 = arith.cmpi eq, %arg0, %c0_i32_25 : i32
    %65 = arith.extui %64 : i1 to i32
    %c0_i32_26 = arith.constant 0 : i32
    %66 = arith.cmpi ne, %65, %c0_i32_26 : i32
    scf.if %66 {
      %c0_27 = arith.constant 0 : index
      %c0_28 = arith.constant 0 : index
      %67 = vector.load %arg7[%c0_27, %c0_28] : memref<1x1xf32, #tpu.memory_space<vmem>>, vector<1x1xf32>
      %cst_29 = arith.constant 3.000000e+02 : f32
      %68 = vector.broadcast %cst_29 : f32 to vector<1x1xf32>
      %69 = arith.subf %68, %67 : vector<1x1xf32>
      %cst_30 = arith.constant 9.99999974E-6 : f32
      %70 = vector.broadcast %cst_30 : f32 to vector<1x1xf32>
      %71 = arith.addf %67, %70 : vector<1x1xf32>
      %72 = arith.divf %69, %71 : vector<1x1xf32>
      %cst_31 = arith.constant 9.99999974E-6 : f32
      %73 = vector.broadcast %cst_31 : f32 to vector<1x1xf32>
      %74 = arith.addf %69, %73 : vector<1x1xf32>
      %75 = arith.divf %67, %74 : vector<1x1xf32>
      %c0_32 = arith.constant 0 : index
      %c0_33 = arith.constant 0 : index
      %76 = vector.load %arg5[%c0_32, %c0_33] : memref<1x1xf32, #tpu.memory_space<vmem>>, vector<1x1xf32>
      %77 = arith.mulf %75, %76 : vector<1x1xf32>
      %c0_34 = arith.constant 0 : index
      %c0_35 = arith.constant 0 : index
      %78 = vector.load %arg6[%c0_34, %c0_35] : memref<1x1xf32, #tpu.memory_space<vmem>>, vector<1x1xf32>
      %79 = arith.mulf %72, %78 : vector<1x1xf32>
      %80 = arith.addf %77, %79 : vector<1x1xf32>
      %81 = arith.mulf %75, %69 : vector<1x1xf32>
      %82 = arith.mulf %72, %67 : vector<1x1xf32>
      %83 = arith.addf %81, %82 : vector<1x1xf32>
      %84 = arith.divf %80, %83 : vector<1x1xf32>
      %c0_36 = arith.constant 0 : index
      %c0_37 = arith.constant 0 : index
      %85 = vector.load %arg4[%c0_36, %c0_37] : memref<1x1xf32, #tpu.memory_space<vmem>>, vector<1x1xf32>
      tpu.vector_store %arg4[%c0_36, %c0_37], %84 {strides = array<i32>} : memref<1x1xf32, #tpu.memory_space<vmem>>, vector<1x1xf32>,
    } else {
    }
    return
  }
  func.func @transform_0(%arg0: i32) -> (i32, i32) {
    %c0_i32 = arith.constant 0 : i32
    %c0_i32_0 = arith.constant 0 : i32
    return %arg0, %c0_i32 : i32, i32
  }
  func.func @transform_1(%arg0: i32) -> (i32, i32) {
    %c0_i32 = arith.constant 0 : i32
    %c0_i32_0 = arith.constant 0 : i32
    return %arg0, %c0_i32 : i32, i32
  }
  func.func @transform_2(%arg0: i32) -> (i32, i32) {
    %c0_i32 = arith.constant 0 : i32
    %c0_i32_0 = arith.constant 0 : i32
    return %arg0, %c0_i32 : i32, i32
  }
  func.func @transform_3(%arg0: i32) -> (i32, i32) {
    %c0_i32 = arith.constant 0 : i32
    %c0_i32_0 = arith.constant 0 : i32
    %c0_i32_1 = arith.constant 0 : i32
    return %c0_i32, %c0_i32_0 : i32, i32
  }
}

</mosaic_0001>

<llo_original>
// kernel: tpu_custom_call.1
$region0: #{tpu_custom_call.1}
  #allocation0 [shape = 'u32[]', space=smem, size = 0x4, offset = 0x4, fixed_abs, tag = 'smem constant byte address 0x4 - core index']
  #allocation1 [shape = 'u32[144,128]{1,0:T(1,128)}', space=vmem, size = 0x12000, scoped, tag = 'internal scratch']
  #allocation2 [shape = 'f32[1,1]{1,0:T(1,128)}', space=vmem, size = 0x200, scoped, tag = 'scratch operand']
  #allocation3 [shape = 'f32[1,1]{1,0:T(1,128)}', space=vmem, size = 0x200, scoped, tag = 'scratch operand']
  #allocation4 [shape = 'f32[1,1]{1,0:T(1,128)}', space=vmem, size = 0x200, scoped, tag = 'scratch operand']
  %s0 = inlined_call_operand.hbm [shape: f32[8,128], index: 0, kind: input, shape index: {}]
  %s1 = inlined_call_operand.hbm [shape: f32[8,128], index: 1, kind: input, shape index: {}]
  %s2 = inlined_call_operand.hbm [shape: s32[8,128], index: 2, kind: input, shape index: {}]
  %s3 = inlined_call_operand.hbm [shape: f32[1,1], index: 3, kind: output, shape index: {}]
  %s4 = sld [smem:[#allocation0]]
  $region42: #{tpu_custom_call.1} parent=0
    _
  %s6 = ssub.s32 1, %s4
  %s7 = scalar_select 0, %s6, %s4
  $region1: #{tpu_custom_call.1} parent=0
    #allocation5 [shape = 'u8[4096]{0}', space=vmem, size = 0x1000, scoped, tag = 'input window, operand 0, single buffered']
    #allocation6 [shape = 's32[1]{0}', space=sflag, size = 0x4, scoped, tag = 'scoped memory for tpu_custom_call.1']
    #allocation7 [shape = 's32[1]{0}', space=sflag, size = 0x4, scoped, tag = 'scoped memory for tpu_custom_call.1']
    #allocation8 [shape = 'u8[4096]{0}', space=vmem, size = 0x1000, scoped, tag = 'input window, operand 1, single buffered']
    #allocation9 [shape = 's32[1]{0}', space=sflag, size = 0x4, scoped, tag = 'scoped memory for tpu_custom_call.1']
    #allocation10 [shape = 'u8[4096]{0}', space=vmem, size = 0x1000, scoped, tag = 'input window, operand 2, single buffered']
    #allocation11 [shape = 'u8[512]{0}', space=vmem, size = 0x400, scoped, tag = 'output window, operand 0, single buffered']
    %8 = vsyncpa [#allocation6], 0
    %9 = vsyncpa [#allocation9], 0
    %10 = vsyncpa [#allocation7], 0
    // Predicated region
    $region2: #{tpu_custom_call.1} parent=1 // pred_check
      _
    $region3: #{tpu_custom_call.1} parent=1 // pred_check_branch
      %12 = sbr.rel (0) target = $region5
    $region4: #{tpu_custom_call.1} parent=1 // pred_region
      %s14 = ssub.s32 128, 128
      %15 = vsyncadd [#allocation6], %s14
      %s17 = sshll.u32 [#allocation5], 4
      %s18 = int_to_ptr.vmem [resolvable:$true] %s17
      %20 = dma.hbm_to_vmem [thread:$0]  %s0, 128, %s18, [#allocation6]
    $region5: #{tpu_custom_call.1} parent=1 // pred_fallthru
      _
    // Predicated region
    $region6: #{tpu_custom_call.1} parent=1 // pred_check
      _
    $region7: #{tpu_custom_call.1} parent=1 // pred_check_branch
      %22 = sbr.rel (0) target = $region9
    $region8: #{tpu_custom_call.1} parent=1 // pred_region
      %s24 = ssub.s32 128, 128
      %25 = vsyncadd [#allocation9], %s24
      %s27 = sshll.u32 [#allocation8], 4
      %s28 = int_to_ptr.vmem [resolvable:$true] %s27
      %30 = dma.hbm_to_vmem [thread:$0]  %s1, 128, %s28, [#allocation9]
    $region9: #{tpu_custom_call.1} parent=1 // pred_fallthru
      _
    // Predicated region
    $region10: #{tpu_custom_call.1} parent=1 // pred_check
      _
    $region11: #{tpu_custom_call.1} parent=1 // pred_check_branch
      %32 = sbr.rel (0) target = $region13
    $region12: #{tpu_custom_call.1} parent=1 // pred_region
      %s34 = ssub.s32 128, 128
      %35 = vsyncadd [#allocation9], %s34
      %s37 = sshll.u32 [#allocation10], 4
      %s38 = int_to_ptr.vmem [resolvable:$true] %s37
      %40 = dma.hbm_to_vmem [thread:$0]  %s2, 128, %s38, [#allocation9]
    $region13: #{tpu_custom_call.1} parent=1 // pred_fallthru
      _
    // Predicated region
    $region14: #{tpu_custom_call.1} parent=1 // pred_check
      _
    $region15: #{tpu_custom_call.1} parent=1 // pred_check_branch
      %42 = sbr.rel (0) target = $region17
    $region16: #{tpu_custom_call.1} parent=1 // pred_region
      %43 = dma.done [#allocation6], 128
    $region17: #{tpu_custom_call.1} parent=1 // pred_fallthru
      _
    // Predicated region
    $region18: #{tpu_custom_call.1} parent=1 // pred_check
      _
    $region19: #{tpu_custom_call.1} parent=1 // pred_check_branch
      %45 = sbr.rel (0) target = $region21
    $region20: #{tpu_custom_call.1} parent=1 // pred_region
      %46 = dma.done [#allocation9], 128
    $region21: #{tpu_custom_call.1} parent=1 // pred_fallthru
      _
    // Predicated region
    $region22: #{tpu_custom_call.1} parent=1 // pred_check
      _
    $region23: #{tpu_custom_call.1} parent=1 // pred_check_branch
      %48 = sbr.rel (0) target = $region25
    $region24: #{tpu_custom_call.1} parent=1 // pred_region
      %49 = dma.done [#allocation9], 128
    $region25: #{tpu_custom_call.1} parent=1 // pred_fallthru
      _
    %p50 = scmp.eq.s32.totalorder 0, 0
    // Predicated region
    $region26: #{tpu_custom_call.1} parent=1 // pred_check
      %p51 = pneg %p50
    $region27: #{tpu_custom_call.1} parent=1 // pred_check_branch
      %53 = sbr.rel (%p51) target = $region29
    $region28: #{tpu_custom_call.1} parent=1 // pred_region
      %vm54 = vcmask 0
      %55 = vst.msk [vmem:[#allocation2] sm:$0x1] %vm54, 0.0
      %56 = vst.msk [vmem:[#allocation3] sm:$0x1] %vm54, 0.0
      %57 = vst.msk [vmem:[#allocation4] sm:$0x1] %vm54, 0.0
    $region29: #{tpu_custom_call.1} parent=1 // pred_fallthru
      _
    %v58 = vld [vmem:[#allocation5] sm:$0xff]
    %v59 = vld [vmem:[#allocation8] sm:$0xff]
    %v60 = vld [vmem:[#allocation10] sm:$0xff]
    %v61 = vlaneseq
    %v62 = vshrl.u32 %v61, 7
    %v63 = vlaneseq
    %v64 = vand.u32 %v63, 127
    %s65 = smul.u32 0, 8
    %v66 = vstv %s65
    %v67 = vadd.s32 %v66, %v62
    %v68 = vmul.u32 %v67, 128
    %v69 = vadd.s32 %v68, %v64
    %vm70 = vcmp.lt.s32.totalorder %v69, 300
    %v71 = vsel %vm70, 1, 0
    %v72 = vcvt.s32.f32 %v71
    %v73 = vsub.f32 %v59, %v58
    %vm74 = vcmp.eq.s32.totalorder %v60, 1
    %v75 = vsub.f32 0.0, %v73
    %v76 = vsel %vm74, %v75, %v73
    %v77 = vmax.f32 %v76, 0.0
    %v78 = vand.u32 2147483647, %v76
    %v79 = vsub.f32 0.0, %v78
    %v80 = vmul.f32 %v79, 1.442695
    %v81 = vpow.pop %v80
    %v82 = vadd.f32 %v81, 1.0
    %v83 = vlog2.pop %v82
    %v84 = vmul.f32 %v83, 0.6931472
    %v85 = vadd.f32 %v77, %v84
    %v86 = vmul.f32 %v85, %v72
    %v87 = vsel %vm74, %v72, 0.0
    %v88 = vld [vmem:[#allocation3] sm:$0x1]
    %v89 = vmul.f32 %v86, %v87
    %90 = vadd.xlane.f32.xlu0 %v89
    %v91 = vpop.xlane.xlu0 %90
    %v92 = vrot.slane %v91, 4
    %v93 = vadd.f32 %v91, %v92
    %v94 = vrot.slane %v93, 2
    %v95 = vadd.f32 %v93, %v94
    %v96 = vrot.slane %v95, 1
    %v97 = vadd.f32 %v95, %v96
    %s98 = vtos %v97
    %v99 = vstv %s98
    %v100 = vadd.f32 %v88, %v99
    %vm101 = vcmask 0
    %102 = vst.msk [vmem:[#allocation3] sm:$0x1] %vm101, %v100
    %v103 = vld [vmem:[#allocation2] sm:$0x1]
    %v104 = vsub.f32 %v72, %v87
    %v105 = vmul.f32 %v86, %v104
    %106 = vadd.xlane.f32.xlu0 %v105
    %v107 = vpop.xlane.xlu0 %106
    %v108 = vrot.slane %v107, 4
    %v109 = vadd.f32 %v107, %v108
    %v110 = vrot.slane %v109, 2
    %v111 = vadd.f32 %v109, %v110
    %v112 = vrot.slane %v111, 1
    %v113 = vadd.f32 %v111, %v112
    %s114 = vtos %v113
    %v115 = vstv %s114
    %v116 = vadd.f32 %v103, %v115
    %117 = vst.msk [vmem:[#allocation2] sm:$0x1] %vm101, %v116
    %v118 = vld [vmem:[#allocation4] sm:$0x1]
    %119 = vadd.xlane.f32.xlu0 %v87
    %v120 = vpop.xlane.xlu0 %119
    %v121 = vrot.slane %v120, 4
    %v122 = vadd.f32 %v120, %v121
    %v123 = vrot.slane %v122, 2
    %v124 = vadd.f32 %v122, %v123
    %v125 = vrot.slane %v124, 1
    %v126 = vadd.f32 %v124, %v125
    %s127 = vtos %v126
    %v128 = vstv %s127
    %v129 = vadd.f32 %v118, %v128
    %130 = vst.msk [vmem:[#allocation4] sm:$0x1] %vm101, %v129
    // Predicated region
    $region30: #{tpu_custom_call.1} parent=1 // pred_check
      %p131 = pneg %p50
    $region31: #{tpu_custom_call.1} parent=1 // pred_check_branch
      %133 = sbr.rel (%p131) target = $region33
    $region32: #{tpu_custom_call.1} parent=1 // pred_region
      %v134 = vld [vmem:[#allocation4] sm:$0x1]
      %v135 = vsub.f32 300.0, %v134
      %v136 = vadd.f32 %v134, 1e-05
      %v137 = vrcp.pop %v136
      %v138 = vmul.f32 %v135, %v137
      %v139 = vadd.f32 %v135, 1e-05
      %v140 = vrcp.pop %v139
      %v141 = vmul.f32 %v134, %v140
      %v142 = vld [vmem:[#allocation2] sm:$0x1]
      %v143 = vmul.f32 %v141, %v142
      %v144 = vld [vmem:[#allocation3] sm:$0x1]
      %v145 = vmul.f32 %v138, %v144
      %v146 = vadd.f32 %v143, %v145
      %v147 = vmul.f32 %v141, %v135
      %v148 = vmul.f32 %v138, %v134
      %v149 = vadd.f32 %v147, %v148
      %v150 = vrcp.pop %v149
      %v151 = vmul.f32 %v146, %v150
      %152 = vst.msk [vmem:[#allocation11] sm:$0x1] %vm101, %v151
    $region33: #{tpu_custom_call.1} parent=1 // pred_fallthru
      _
    // Predicated region
    $region34: #{tpu_custom_call.1} parent=1 // pred_check
      _
    $region35: #{tpu_custom_call.1} parent=1 // pred_check_branch
      %154 = sbr.rel (0) target = $region37
    $region36: #{tpu_custom_call.1} parent=1 // pred_region
      %s156 = ssub.s32 16, 16
      %157 = vsyncadd [#allocation7], %s156
      %s159 = sshll.u32 [#allocation11], 4
      %s160 = int_to_ptr.vmem [resolvable:$true] %s159
      %162 = dma.vmem_to_hbm [thread:$0]  %s160, 16, %s3, [#allocation7]
    $region37: #{tpu_custom_call.1} parent=1 // pred_fallthru
      _
    // Predicated region
    $region38: #{tpu_custom_call.1} parent=1 // pred_check
      _
    $region39: #{tpu_custom_call.1} parent=1 // pred_check_branch
      %164 = sbr.rel (0) target = $region41
    $region40: #{tpu_custom_call.1} parent=1 // pred_region
      %165 = dma.done [#allocation7], 16
    $region41: #{tpu_custom_call.1} parent=1 // pred_fallthru
      _
    %166 = vsyncpa [#allocation6], 1
    %167 = vsyncpa [#allocation9], 1
    %168 = vsyncpa [#allocation7], 1

</llo_original>
